<compile_context>
chip_gen: v7x
topology: tpu7x:2x2x1
jax: 0.10.0
libtpu: 0.0.40
codegen_flags: <defaults>
</compile_context>

<pallas_src>
import math

import jax
import jax.numpy as jnp
import numpy as np
from jax.experimental import pallas as pl
from jax.experimental.pallas import tpu as pltpu

_LANE = 128
_SUBLANE = 8


# ----------------------------- weight init ----------------------------------
def orthogonal_(key, shape, gain):
    """Orthogonal init matching torch.nn.init.orthogonal_ semantics."""
    rows, cols = shape  # torch Linear weight is (out_features, in_features)
    a = jax.random.normal(key, (rows, cols), dtype=jnp.float32)
    if rows < cols:
        a = a.T
    q, r = jnp.linalg.qr(a)
    d = jnp.sign(jnp.diag(r))
    q = q * d[None, :]
    if rows < cols:
        q = q.T
    return gain * q


def init_inverse_model_params(key, feature_dim, act_dim, hidden_sizes):
    """Returns [(W, b), ...] with torch Linear layout W: (out, in)."""
    if not isinstance(hidden_sizes, (list, tuple)):
        hidden_sizes = [hidden_sizes]
    dims = [2 * feature_dim] + list(hidden_sizes)
    params = []
    gain_hidden = float(np.sqrt(2.0))
    for i in range(len(dims) - 1):
        key, sub = jax.random.split(key)
        w = orthogonal_(sub, (dims[i + 1], dims[i]), gain_hidden)
        b = jnp.zeros((dims[i + 1],), jnp.float32)
        params.append((w, b))
    key, sub = jax.random.split(key)
    w_out = orthogonal_(sub, (act_dim, dims[-1]), 0.01)
    b_out = jnp.zeros((act_dim,), jnp.float32)
    params.append((w_out, b_out))
    return params


# --------------------------- weight packing ----------------------------------
def _round_up(x, m):
    return ((x + m - 1) // m) * m


def pack_inverse_model_params(params, feature_dim, compute_dtype=jnp.float32,
                              lane_multiple=_LANE):
    """Pack torch-layout params ONCE (outside the hot path) for the kernel.

    * first-layer weight split into x_t / x_{t+1} halves and packed as ONE
      (F, 2*h0_p) matrix [W0_curr | W0_next]  (fused first-layer matmul),
    * remaining weights transposed to (in, out) -- the MXU (K, N) layout,
    * hidden dims zero-padded to `lane_multiple` (use 256 on v6e/v7x for full
      MXU column utilization, 128 elsewhere),
    * the FINAL layer is padded to a multiple of 128 lanes too (lane-dense
      output stores); the wrapper slices the valid act_dim columns,
    * weights cast to compute_dtype; biases stay float32 (added to the f32
      accumulator).
    Returns the flat list [W0_cat, b0, W1, b1, ..., Wn, bn].
    """
    n = len(params)
    F = feature_dim
    packed = []

    w0, b0 = params[0]
    h0 = int(w0.shape[0])
    h0_p = _round_up(h0, _LANE if n == 1 else lane_multiple)
    w0 = jnp.asarray(w0, jnp.float32)
    w0cat = jnp.zeros((F, 2 * h0_p), jnp.float32)
    w0cat = w0cat.at[:, :h0].set(w0[:, :F].T)                # x_t half
    w0cat = w0cat.at[:, h0_p:h0_p + h0].set(w0[:, F:].T)     # x_{t+1} half
    b0p = jnp.zeros((1, h0_p), jnp.float32).at[:, :h0].set(
        jnp.asarray(b0, jnp.float32)[None, :])
    packed += [w0cat.astype(compute_dtype), b0p]

    prev, prev_p = h0, h0_p
    for i in range(1, n):
        w, b = params[i]
        out_i = int(w.shape[0])
        out_p = _round_up(out_i, _LANE if i == n - 1 else lane_multiple)
        wt = jnp.zeros((prev_p, out_p), jnp.float32)
        wt = wt.at[:prev, :out_i].set(jnp.asarray(w, jnp.float32).T)
        bp = jnp.zeros((1, out_p), jnp.float32).at[:, :out_i].set(
            jnp.asarray(b, jnp.float32)[None, :])
        packed += [wt.astype(compute_dtype), bp]
        prev, prev_p = out_i, out_p
    return packed


# ------------------------------- kernel --------------------------------------
def _inverse_mlp_kernel(x_ref, *refs):
    """MLP with the ICM time-shift fused in.

    refs = (W0_cat, b0, W1, b1, ..., Wn, bn, o_ref, stage)

    Block rows are (batch-in-tile, time) flattened, so row r's "next timestep"
    features live at row r+1.  Rows with local time index T-1 pick up a
    neighbouring batch's data (or the staging tail); the wrapper drops them.
    """
    o_ref, stage = refs[-2], refs[-1]
    wb = refs[:-2]

    rows = x_ref.shape[0]
    F = x_ref.shape[1]
    w0 = wb[0][...]
    b0 = wb[1][...]
    h0_p = w0.shape[1] // 2
    cdt = w0.dtype

    x = x_ref[...]

    # Zero the 8-row tail of the staging buffer ONCE; scratch persists across
    # grid iterations.  The tail only ever feeds the last (dropped) row of a
    # block, so this is hygiene (keeps dropped rows finite), not correctness.
    @pl.when(pl.program_id(0) == 0)
    def _zero_tail():
        stage[pl.ds(rows, _SUBLANE), :] = jnp.zeros(
            (_SUBLANE, stage.shape[1]), stage.dtype)

    if F <= h0_p:
        # Narrow-shift path: round-trip only the (rows, F) features through the
        # f32 staging buffer (read back at a +1 row offset = next timestep),
        # then two matmuls against the two packed W0 halves.
        stage[pl.ds(0, rows), :] = x.astype(jnp.float32)
        x_next = stage[pl.ds(1, rows), :]
        h = (jnp.dot(x.astype(cdt), w0[:, :h0_p],
                     preferred_element_type=jnp.float32)
             + jnp.dot(x_next.astype(cdt), w0[:, h0_p:],
                       preferred_element_type=jnp.float32)
             + b0)
    else:
        # Fused path: one MXU pass with N = 2*h0_p (full columns on v6e/v7x),
        # then shift only the narrower h_next half through the staging buffer.
        hh = jnp.dot(x.astype(cdt), w0, preferred_element_type=jnp.float32)
        stage[pl.ds(0, rows), :] = hh[:, h0_p:]
        h = hh[:, :h0_p] + stage[pl.ds(1, rows), :] + b0

    # Remaining layers: ReLU after every hidden layer, none after the output.
    idx = 2
    n_rest = (len(wb) - 2) // 2
    for _ in range(n_rest):
        h = jnp.maximum(h, 0.0)
        w = wb[idx][...]
        b = wb[idx + 1][...]
        idx += 2
        h = jnp.dot(h.astype(w.dtype), w, preferred_element_type=jnp.float32) + b

    o_ref[...] = h.astype(o_ref.dtype)


# ------------------------------- wrapper --------------------------------------
def _pick_batch_tile(batch, time, target_rows=2048):
    """Batch tile size TB such that TB*time is sublane (8) aligned, roughly
    target_rows rows per block, and the (cdiv) grid has >= 2 steps whenever the
    batch allows it (v7x two-TensorCore split)."""
    step = _SUBLANE // math.gcd(time, _SUBLANE)     # granularity for 8-alignment
    tb = max(step, (target_rows // max(time, 1)) // step * step)
    tb = min(tb, _round_up(batch, step))
    if batch >= 2 * step:
        while tb > step and pl.cdiv(batch, tb) < 2:
            tb -= step
    return tb


def inverse_model_forward(features, packed_params, act_dim, *,
                          target_block_rows=2048):
    """features: [B, T, F] -> act_pred: [B, T-1, act_dim] (float32)."""
    B, T, F = features.shape
    assert T >= 2, "need at least two timesteps"

    # Free reshape (contiguous collapse).  NO dtype cast here: a wrapper-side
    # astype would be an extra full HBM round-trip; the kernel casts in VMEM.
    x2 = features.reshape(B * T, F)

    h0_p = int(packed_params[0].shape[1]) // 2
    act_p = int(packed_params[-2].shape[1])          # lane-padded output width
    tb = _pick_batch_tile(B, T, target_block_rows)
    rows = tb * T
    grid = (pl.cdiv(B, tb),)
    stage_w = F if F <= h0_p else h0_p               # width of the shift buffer

    in_specs = [pl.BlockSpec((rows, F), lambda i: (i, 0))]
    # Weights / biases: full-array blocks with constant index_map -> DMA'd
    # once, resident in VMEM across all grid steps.
    for p in packed_params:
        in_specs.append(pl.BlockSpec(p.shape, lambda i: (0, 0)))
    out_specs = pl.BlockSpec((rows, act_p), lambda i: (i, 0))

    # Explicit VMEM budget (v7x has only 64 MiB/TC physical): 2x pipelined
    # x/out buffers + 2x resident weights + the staging scratch, with headroom.
    def _nbytes(shape, dt):
        return int(np.prod(shape)) * np.dtype(dt).itemsize
    need = (2 * _nbytes((rows, F), x2.dtype)
            + 2 * _nbytes((rows, act_p), jnp.float32)
            + sum(2 * int(p.size) * p.dtype.itemsize for p in packed_params)
            + _nbytes((rows + _SUBLANE, stage_w), jnp.float32))
    vmem_limit = int(min(max(2 * need, 32 << 20), 64 << 20))

    # Advisory cost estimate for the XLA scheduler.
    flops = 2 * (B * T) * F * (2 * h0_p)
    idx = 2
    while idx < len(packed_params):
        w = packed_params[idx]
        flops += 2 * (B * T) * int(w.shape[0]) * int(w.shape[1])
        idx += 2
    bytes_accessed = (x2.size * x2.dtype.itemsize
                      + B * T * act_p * 4
                      + sum(int(p.size) * p.dtype.itemsize for p in packed_params))

    out2 = pl.pallas_call(
        _inverse_mlp_kernel,
        out_shape=jax.ShapeDtypeStruct((B * T, act_p), jnp.float32),
        grid=grid,
        in_specs=in_specs,
        out_specs=out_specs,
        scratch_shapes=[pltpu.VMEM((rows + _SUBLANE, stage_w), jnp.float32)],
        compiler_params=pltpu.CompilerParams(
            dimension_semantics=("parallel",),
            vmem_limit_bytes=vmem_limit),
        cost_estimate=pl.CostEstimate(
            flops=flops, transcendentals=0, bytes_accessed=bytes_accessed),
    )(x2, *packed_params)

    # Drop the invalid t = T-1 rows (their "next" row belongs to another batch
    # element) and the zero-padded output lanes.  Never consume out2 un-sliced.
    return out2.reshape(B, T, act_p)[:, :T - 1, :act_dim]


# ------------------------------ reference ------------------------------------
def inverse_model_forward_ref(features, params, act_dim):
    B, T, F = features.shape
    x = jnp.concatenate(
        [features[:, :-1].reshape(B * (T - 1), F),
         features[:, 1:].reshape(B * (T - 1), F)], axis=-1)
    h = x
    n = len(params)
    for i, (w, b) in enumerate(params):
        h = h @ w.T + b
        if i < n - 1:
            h = jnp.maximum(h, 0.0)
    return h.reshape(B, T - 1, act_dim)


# -------------------------------- main ----------------------------------------
if __name__ == "__main__":
    key = jax.random.PRNGKey(0)

    # --- config 1: F <= h0_p  (narrow x-shift path), f32 and bf16 ------------
    B, T = 2, 8
    feature_dim, act_dim, hidden_sizes = 16, 4, [32]
    key, k_param, k_feat = jax.random.split(key, 3)
    params = init_inverse_model_params(k_param, feature_dim, act_dim, hidden_sizes)
    features = jax.random.normal(k_feat, (B, T, feature_dim), dtype=jnp.float32)
    ref = inverse_model_forward_ref(features, params, act_dim)

    packed_f32 = pack_inverse_model_params(params, feature_dim, jnp.float32)
    out = jax.block_until_ready(inverse_model_forward(features, packed_f32, act_dim))
    np.testing.assert_allclose(np.asarray(out), np.asarray(ref),
                               rtol=1e-5, atol=1e-5)
    assert out.shape == (B, T - 1, act_dim)

    # bf16 weights / bf16 MXU with f32 accumulation; features stay f32 in HBM
    # and are cast inside the kernel (no wrapper-side astype pass).
    packed_bf16 = pack_inverse_model_params(params, feature_dim, jnp.bfloat16)
    out_bf16 = jax.block_until_ready(
        inverse_model_forward(features, packed_bf16, act_dim))
    np.testing.assert_allclose(np.asarray(out_bf16), np.asarray(ref),
                               rtol=1e-1, atol=1e-2)

    # --- config 2: F > h0_p  (fused first-layer matmul + h_next-shift path) ---
    B2, T2, F2, A2, H2 = 2, 8, 192, 6, [64]
    key, k_param2, k_feat2 = jax.random.split(key, 3)
    params2 = init_inverse_model_params(k_param2, F2, A2, H2)
    features2 = jax.random.normal(k_feat2, (B2, T2, F2), dtype=jnp.float32)
    ref2 = inverse_model_forward_ref(features2, params2, A2)

    packed2 = pack_inverse_model_params(params2, F2, jnp.float32)
    out2 = jax.block_until_ready(inverse_model_forward(features2, packed2, A2))
    np.testing.assert_allclose(np.asarray(out2), np.asarray(ref2),
                               rtol=1e-5, atol=1e-5)
    assert out2.shape == (B2, T2 - 1, A2)

    print("KERNEL_OK")
</pallas_src>

<mosaic_0001>
module attributes {stable_mosaic.version = 11 : i64} {
  func.func @_inverse_mlp_kernel(%arg0: i32, %arg1: memref<8x16xf32, #tpu.memory_space<vmem>>, %arg2: memref<16x256xf32, #tpu.memory_space<vmem>>, %arg3: memref<1x128xf32, #tpu.memory_space<vmem>>, %arg4: memref<128x128xf32, #tpu.memory_space<vmem>>, %arg5: memref<1x128xf32, #tpu.memory_space<vmem>>, %arg6: memref<8x128xf32, #tpu.memory_space<vmem>>, %arg7: memref<16x16xf32, #tpu.memory_space<vmem>>) attributes {dimension_semantics = [#tpu.dimension_semantics<parallel>], iteration_bounds = array<i64: 2>, scalar_prefetch = 0 : i64, scratch_operands = 1 : i64, tpu.core_type = #tpu.core_type<tc>, window_params = [{transform_indices = @transform_0, window_bounds = array<i64: 8, 16>}, {pipeline_mode = #tpu.pipeline_mode<synchronous>, transform_indices = @transform_1, window_bounds = array<i64: 16, 256>}, {pipeline_mode = #tpu.pipeline_mode<synchronous>, transform_indices = @transform_2, window_bounds = array<i64: 1, 128>}, {pipeline_mode = #tpu.pipeline_mode<synchronous>, transform_indices = @transform_3, window_bounds = array<i64: 128, 128>}, {pipeline_mode = #tpu.pipeline_mode<synchronous>, transform_indices = @transform_4, window_bounds = array<i64: 1, 128>}, {transform_indices = @transform_5, window_bounds = array<i64: 8, 128>}]} {
    %c0 = arith.constant 0 : index
    %c0_0 = arith.constant 0 : index
    %0 = vector.load %arg2[%c0, %c0_0] : memref<16x256xf32, #tpu.memory_space<vmem>>, vector<16x256xf32>
    %c0_1 = arith.constant 0 : index
    %c0_2 = arith.constant 0 : index
    %1 = vector.load %arg3[%c0_1, %c0_2] : memref<1x128xf32, #tpu.memory_space<vmem>>, vector<1x128xf32>
    %c0_3 = arith.constant 0 : index
    %c0_4 = arith.constant 0 : index
    %2 = vector.load %arg1[%c0_3, %c0_4] : memref<8x16xf32, #tpu.memory_space<vmem>>, vector<8x16xf32>
    %c0_i32 = arith.constant 0 : i32
    %3 = arith.cmpi eq, %arg0, %c0_i32 : i32
    %4 = arith.extui %3 : i1 to i32
    %c0_i32_5 = arith.constant 0 : i32
    %5 = arith.cmpi ne, %4, %c0_i32_5 : i32
    scf.if %5 {
      %cst_18 = arith.constant 0.000000e+00 : f32
      %23 = vector.broadcast %cst_18 : f32 to vector<8x16xf32>
      %c8 = arith.constant 8 : index
      %c0_19 = arith.constant 0 : index
      %24 = vector.load %arg7[%c8, %c0_19] : memref<16x16xf32, #tpu.memory_space<vmem>>, vector<8x16xf32>
      tpu.vector_store %arg7[%c8, %c0_19], %23 {strides = array<i32>} : memref<16x16xf32, #tpu.memory_space<vmem>>, vector<8x16xf32>,
    } else {
    }
    %c0_6 = arith.constant 0 : index
    %c0_7 = arith.constant 0 : index
    %6 = vector.load %arg7[%c0_6, %c0_7] : memref<16x16xf32, #tpu.memory_space<vmem>>, vector<8x16xf32>
    tpu.vector_store %arg7[%c0_6, %c0_7], %2 {strides = array<i32>} : memref<16x16xf32, #tpu.memory_space<vmem>>, vector<8x16xf32>,
    %c1 = arith.constant 1 : index
    %c0_8 = arith.constant 0 : index
    %7 = vector.load %arg7[%c1, %c0_8] : memref<16x16xf32, #tpu.memory_space<vmem>>, vector<8x16xf32>
    %8 = vector.extract_strided_slice %0 {offsets = [0, 0], sizes = [16, 128], strides = [1, 1]} : vector<16x256xf32> to vector<16x128xf32>
    %cst = arith.constant dense<0.000000e+00> : vector<8x128xf32>
    %9 = tpu.matmul %2, %8, %cst {dimension_numbers = #tpu.dot_dimension_numbers<[1], [0], [0], [1], [0, 0, 1, 1], [], []>} : vector<8x16xf32>, vector<16x128xf32>, vector<8x128xf32> -> vector<8x128xf32>
    %10 = vector.extract_strided_slice %0 {offsets = [0, 128], sizes = [16, 128], strides = [1, 1]} : vector<16x256xf32> to vector<16x128xf32>
    %cst_9 = arith.constant dense<0.000000e+00> : vector<8x128xf32>
    %11 = tpu.matmul %7, %10, %cst_9 {dimension_numbers = #tpu.dot_dimension_numbers<[1], [0], [0], [1], [0, 0, 1, 1], [], []>} : vector<8x16xf32>, vector<16x128xf32>, vector<8x128xf32> -> vector<8x128xf32>
    %12 = arith.addf %9, %11 : vector<8x128xf32>
    %13 = vector.broadcast %1 : vector<1x128xf32> to vector<8x128xf32>
    %14 = arith.addf %12, %13 : vector<8x128xf32>
    %cst_10 = arith.constant 0.000000e+00 : f32
    %15 = vector.broadcast %cst_10 : f32 to vector<8x128xf32>
    %16 = arith.maximumf %14, %15 : vector<8x128xf32>
    %c0_11 = arith.constant 0 : index
    %c0_12 = arith.constant 0 : index
    %17 = vector.load %arg4[%c0_11, %c0_12] : memref<128x128xf32, #tpu.memory_space<vmem>>, vector<128x128xf32>
    %c0_13 = arith.constant 0 : index
    %c0_14 = arith.constant 0 : index
    %18 = vector.load %arg5[%c0_13, %c0_14] : memref<1x128xf32, #tpu.memory_space<vmem>>, vector<1x128xf32>
    %cst_15 = arith.constant dense<0.000000e+00> : vector<8x128xf32>
    %19 = tpu.matmul %16, %17, %cst_15 {dimension_numbers = #tpu.dot_dimension_numbers<[1], [0], [0], [1], [0, 0, 1, 1], [], []>} : vector<8x128xf32>, vector<128x128xf32>, vector<8x128xf32> -> vector<8x128xf32>
    %20 = vector.broadcast %18 : vector<1x128xf32> to vector<8x128xf32>
    %21 = arith.addf %19, %20 : vector<8x128xf32>
    %c0_16 = arith.constant 0 : index
    %c0_17 = arith.constant 0 : index
    %22 = vector.load %arg6[%c0_16, %c0_17] : memref<8x128xf32, #tpu.memory_space<vmem>>, vector<8x128xf32>
    tpu.vector_store %arg6[%c0_16, %c0_17], %21 {strides = array<i32>} : memref<8x128xf32, #tpu.memory_space<vmem>>, vector<8x128xf32>,
    return
  }
  func.func @transform_0(%arg0: i32) -> (i32, i32) {
    %c0_i32 = arith.constant 0 : i32
    %c0_i32_0 = arith.constant 0 : i32
    return %arg0, %c0_i32 : i32, i32
  }
  func.func @transform_1(%arg0: i32) -> (i32, i32) {
    %c0_i32 = arith.constant 0 : i32
    %c0_i32_0 = arith.constant 0 : i32
    %c0_i32_1 = arith.constant 0 : i32
    return %c0_i32, %c0_i32_0 : i32, i32
  }
  func.func @transform_2(%arg0: i32) -> (i32, i32) {
    %c0_i32 = arith.constant 0 : i32
    %c0_i32_0 = arith.constant 0 : i32
    %c0_i32_1 = arith.constant 0 : i32
    return %c0_i32, %c0_i32_0 : i32, i32
  }
  func.func @transform_3(%arg0: i32) -> (i32, i32) {
    %c0_i32 = arith.constant 0 : i32
    %c0_i32_0 = arith.constant 0 : i32
    %c0_i32_1 = arith.constant 0 : i32
    return %c0_i32, %c0_i32_0 : i32, i32
  }
  func.func @transform_4(%arg0: i32) -> (i32, i32) {
    %c0_i32 = arith.constant 0 : i32
    %c0_i32_0 = arith.constant 0 : i32
    %c0_i32_1 = arith.constant 0 : i32
    return %c0_i32, %c0_i32_0 : i32, i32
  }
  func.func @transform_5(%arg0: i32) -> (i32, i32) {
    %c0_i32 = arith.constant 0 : i32
    %c0_i32_0 = arith.constant 0 : i32
    return %arg0, %c0_i32 : i32, i32
  }
}

</mosaic_0001>

<llo_original>
// kernel: tpu_custom_call.1
$region0: #{tpu_custom_call.1}
  #allocation0 [shape = 'u32[]', space=smem, size = 0x4, offset = 0x4, fixed_abs, tag = 'smem constant byte address 0x4 - core index']
  #allocation1 [shape = 'u32[144,128]{1,0:T(1,128)}', space=vmem, size = 0x12000, scoped, tag = 'internal scratch']
  #allocation2 [shape = 'f32[16,16]{1,0:T(8,128)}', space=vmem, size = 0x2000, scoped, tag = 'scratch operand']
  %s0 = inlined_call_operand.hbm [shape: f32[16,16], index: 0, kind: input, shape index: {}]
  %s1 = inlined_call_operand.hbm [shape: f32[16,256], index: 1, kind: input, shape index: {}]
  %s2 = inlined_call_operand.vmem [shape: f32[1,128], index: 2, kind: input, shape index: {}]
  %s3 = inlined_call_operand.hbm [shape: f32[128,128], index: 3, kind: input, shape index: {}]
  %s4 = inlined_call_operand.vmem [shape: f32[1,128], index: 4, kind: input, shape index: {}]
  %s5 = inlined_call_operand.hbm [shape: f32[16,128], index: 5, kind: output, shape index: {}]
  %s6 = sld [smem:[#allocation0]]
  $region69: #{tpu_custom_call.1} parent=0
    _
  %s8 = ssub.s32 1, %s6
  %s9 = scalar_select 0, %s8, %s6
  $region1: #{tpu_custom_call.1} parent=0
    #allocation3 [shape = 'u8[8192]{0}', space=vmem, size = 0x2000, scoped, tag = 'input window, operand 0']
    #allocation4 [shape = 's32[2]{0}', space=sflag, size = 0x8, scoped, tag = 'scoped memory for tpu_custom_call.1']
    #allocation5 [shape = 's32[2]{0}', space=sflag, size = 0x8, scoped, tag = 'scoped memory for tpu_custom_call.1']
    #allocation6 [shape = 'u8[16384]{0}', space=vmem, size = 0x4000, scoped, tag = 'input window, operand 1, single buffered']
    #allocation7 [shape = 's32[1]{0}', space=sflag, size = 0x4, scoped, tag = 'scoped memory for tpu_custom_call.1']
    #allocation8 [shape = 'u8[65536]{0}', space=vmem, size = 0x10000, scoped, tag = 'input window, operand 3, single buffered']
    #allocation9 [shape = 'u8[8192]{0}', space=vmem, size = 0x2000, scoped, tag = 'output window, operand 0']
    %10 = vsyncpa [#allocation4], 0
    %s11 = scalar_lea.sflag [#allocation4], 1
    %12 = vsyncpa %s11, 0
    %13 = vsyncpa [#allocation7], 0
    %14 = vsyncpa [#allocation5], 0
    %s15 = scalar_lea.sflag [#allocation5], 1
    %16 = vsyncpa %s15, 0
    loop: start=0, step=1, limit=4
    $region2: #{tpu_custom_call.1} parent=1 // loop_pre_header
      _
    $region3: #{tpu_custom_call.1} parent=1 // loop_header
      %s18 = sphi 0, %s22
      %p19 = scmp.ge.s32.totalorder %s18, 4
      %s28 = sphi 0, %s30
      %s31 = sphi 0, %s28
      %s32 = sphi 0, %s31
      %s48 = sphi 0, %s32
      %s52 = sphi 0, %s52
      %s54 = sphi 0, %s52
      %s55 = sphi 0, %s54
      %s69 = sphi 0, %s55
      %s73 = sphi 0, %s73
      %s75 = sphi 0, %s73
      %s76 = sphi 0, %s75
      %s90 = sphi 0, %s76
      %s94 = sphi 0, %s94
      %s96 = sphi 0, %s94
      %s97 = sphi 0, %s96
      %s111 = sphi 0, %s97
      %s115 = sphi 0, %s115
      %s117 = sphi 0, %s115
      %s118 = sphi 0, %s117
      %s132 = sphi 0, %s118
      %s138 = sphi 0, %s140
      %s141 = sphi 0, %s138
      %s142 = sphi 0, %s141
      %s158 = sphi 0, %s142
    $region4: #{tpu_custom_call.1} parent=1 // loop_header_branch
      %21 = sbr.rel (%p19) target = $region8
    $region5: #{tpu_custom_call.1} parent=1 // loop_body
      %s23 = ssub.s32 %s18, 1
      %s24 = ssub.s32 %s18, 2
      %s25 = sadd.s32 %s18, 1
      %s26 = ssub.s32 %s18, %s25
      %p27 = scmp.eq.s32.totalorder %s26, 0
      %s29 = sadd.s32 %s28, 1
      %s30 = scalar_select %p27, %s28, %s29
      %p33 = pneg %p27
      %p34 = scmp.eq.s32.totalorder %s18, 1
      %p35 = por %p33, %p34
      %p36 = scmp.ne.s32.totalorder %s28, %s31
      %p37 = scmp.eq.s32.totalorder %s18, 0
      %p38 = por %p36, %p37
      %p39 = scmp.ne.s32.totalorder %s28, %s31
      %p40 = scmp.eq.s32.totalorder %s23, 1
      %p41 = por %p39, %p40
      %p42 = scmp.ne.s32.totalorder %s31, %s32
      %p43 = scmp.eq.s32.totalorder %s23, 0
      %p44 = por %p42, %p43
      %p45 = scmp.ne.s32.totalorder %s31, %s32
      %p46 = scmp.eq.s32.totalorder %s24, 1
      %p47 = por %p45, %p46
      %p49 = scmp.ne.s32.totalorder %s32, %s48
      %p50 = scmp.eq.s32.totalorder %s24, 0
      %p51 = por %p49, %p50
      %s53 = sadd.s32 %s52, 1
      %p56 = scmp.eq.s32.totalorder %s18, 1
      %p57 = scmp.ne.s32.totalorder %s52, %s54
      %p58 = scmp.eq.s32.totalorder %s18, 0
      %p59 = por %p57, %p58
      %p60 = scmp.ne.s32.totalorder %s52, %s54
      %p61 = scmp.eq.s32.totalorder %s23, 1
      %p62 = por %p60, %p61
      %p63 = scmp.ne.s32.totalorder %s54, %s55
      %p64 = scmp.eq.s32.totalorder %s23, 0
      %p65 = por %p63, %p64
      %p66 = scmp.ne.s32.totalorder %s54, %s55
      %p67 = scmp.eq.s32.totalorder %s24, 1
      %p68 = por %p66, %p67
      %p70 = scmp.ne.s32.totalorder %s55, %s69
      %p71 = scmp.eq.s32.totalorder %s24, 0
      %p72 = por %p70, %p71
      %s74 = sadd.s32 %s73, 1
      %p77 = scmp.eq.s32.totalorder %s18, 1
      %p78 = scmp.ne.s32.totalorder %s73, %s75
      %p79 = scmp.eq.s32.totalorder %s18, 0
      %p80 = por %p78, %p79
      %p81 = scmp.ne.s32.totalorder %s73, %s75
      %p82 = scmp.eq.s32.totalorder %s23, 1
      %p83 = por %p81, %p82
      %p84 = scmp.ne.s32.totalorder %s75, %s76
      %p85 = scmp.eq.s32.totalorder %s23, 0
      %p86 = por %p84, %p85
      %p87 = scmp.ne.s32.totalorder %s75, %s76
      %p88 = scmp.eq.s32.totalorder %s24, 1
      %p89 = por %p87, %p88
      %p91 = scmp.ne.s32.totalorder %s76, %s90
      %p92 = scmp.eq.s32.totalorder %s24, 0
      %p93 = por %p91, %p92
      %s95 = sadd.s32 %s94, 1
      %p98 = scmp.eq.s32.totalorder %s18, 1
      %p99 = scmp.ne.s32.totalorder %s94, %s96
      %p100 = scmp.eq.s32.totalorder %s18, 0
      %p101 = por %p99, %p100
      %p102 = scmp.ne.s32.totalorder %s94, %s96
      %p103 = scmp.eq.s32.totalorder %s23, 1
      %p104 = por %p102, %p103
      %p105 = scmp.ne.s32.totalorder %s96, %s97
      %p106 = scmp.eq.s32.totalorder %s23, 0
      %p107 = por %p105, %p106
      %p108 = scmp.ne.s32.totalorder %s96, %s97
      %p109 = scmp.eq.s32.totalorder %s24, 1
      %p110 = por %p108, %p109
      %p112 = scmp.ne.s32.totalorder %s97, %s111
      %p113 = scmp.eq.s32.totalorder %s24, 0
      %p114 = por %p112, %p113
      %s116 = sadd.s32 %s115, 1
      %p119 = scmp.eq.s32.totalorder %s18, 1
      %p120 = scmp.ne.s32.totalorder %s115, %s117
      %p121 = scmp.eq.s32.totalorder %s18, 0
      %p122 = por %p120, %p121
      %p123 = scmp.ne.s32.totalorder %s115, %s117
      %p124 = scmp.eq.s32.totalorder %s23, 1
      %p125 = por %p123, %p124
      %p126 = scmp.ne.s32.totalorder %s117, %s118
      %p127 = scmp.eq.s32.totalorder %s23, 0
      %p128 = por %p126, %p127
      %p129 = scmp.ne.s32.totalorder %s117, %s118
      %p130 = scmp.eq.s32.totalorder %s24, 1
      %p131 = por %p129, %p130
      %p133 = scmp.ne.s32.totalorder %s118, %s132
      %p134 = scmp.eq.s32.totalorder %s24, 0
      %p135 = por %p133, %p134
      %s136 = ssub.s32 %s18, %s25
      %p137 = scmp.eq.s32.totalorder %s136, 0
      %s139 = sadd.s32 %s138, 1
      %s140 = scalar_select %p137, %s138, %s139
      %p143 = pneg %p137
      %p144 = scmp.eq.s32.totalorder %s18, 1
      %p145 = por %p143, %p144
      %p146 = scmp.ne.s32.totalorder %s138, %s141
      %p147 = scmp.eq.s32.totalorder %s18, 0
      %p148 = por %p146, %p147
      %p149 = scmp.ne.s32.totalorder %s138, %s141
      %p150 = scmp.eq.s32.totalorder %s23, 1
      %p151 = por %p149, %p150
      %p152 = scmp.ne.s32.totalorder %s141, %s142
      %p153 = scmp.eq.s32.totalorder %s23, 0
      %p154 = por %p152, %p153
      %p155 = scmp.ne.s32.totalorder %s141, %s142
      %p156 = scmp.eq.s32.totalorder %s24, 1
      %p157 = por %p155, %p156
      %p159 = scmp.ne.s32.totalorder %s142, %s158
      %p160 = scmp.eq.s32.totalorder %s24, 0
      %p161 = por %p159, %p160
      %p162 = scmp.le.s32.totalorder 1, %s18
      %p163 = scmp.lt.s32.totalorder %s18, 3
      %p164 = pnand %p162, %p163
      %p165 = pneg %p164
      // Predicated region
      $region9: #{tpu_custom_call.1} parent=5 // pred_check
        _
      $region10: #{tpu_custom_call.1} parent=5 // pred_check_branch
        %167 = sbr.rel (%p164) target = $region12
      $region11: #{tpu_custom_call.1} parent=5 // pred_region
        %s168 = ssub.s32 %s18, 1
        // Predicated region
        $region13: #{tpu_custom_call.1} parent=11 // pred_check
          %p169 = pneg %p65
        $region14: #{tpu_custom_call.1} parent=11 // pred_check_branch
          %171 = sbr.rel (%p169) target = $region16
        $region15: #{tpu_custom_call.1} parent=11 // pred_region
          %s173 = ssub.s32 512, 512
          %174 = vsyncadd [#allocation7], %s173
          %s175 = sshll.u32 [#allocation6], 4
          %s176 = int_to_ptr.vmem [resolvable:$true] %s175
          %181 = dma.hbm_to_vmem [thread:$0]  %s1, 512, %s176, [#allocation7], 256, 256, 16
        $region16: #{tpu_custom_call.1} parent=11 // pred_fallthru
          _
        // Predicated region
        $region17: #{tpu_custom_call.1} parent=11 // pred_check
          %p182 = pneg %p86
        $region18: #{tpu_custom_call.1} parent=11 // pred_check_branch
          %184 = sbr.rel (%p182) target = $region20
        $region19: #{tpu_custom_call.1} parent=11 // pred_region
          _
        $region20: #{tpu_custom_call.1} parent=11 // pred_fallthru
          _
        // Predicated region
        $region21: #{tpu_custom_call.1} parent=11 // pred_check
          %p185 = pneg %p107
        $region22: #{tpu_custom_call.1} parent=11 // pred_check_branch
          %187 = sbr.rel (%p185) target = $region24
        $region23: #{tpu_custom_call.1} parent=11 // pred_region
          %s189 = ssub.s32 2048, 2048
          %190 = vsyncadd [#allocation7], %s189
          %s191 = sshll.u32 [#allocation8], 4
          %s192 = int_to_ptr.vmem [resolvable:$true] %s191
          %197 = dma.hbm_to_vmem [thread:$0]  %s3, 2048, %s192, [#allocation7], 128, 128, 8
        $region24: #{tpu_custom_call.1} parent=11 // pred_fallthru
          _
        // Predicated region
        $region25: #{tpu_custom_call.1} parent=11 // pred_check
          %p198 = pneg %p128
        $region26: #{tpu_custom_call.1} parent=11 // pred_check_branch
          %200 = sbr.rel (%p198) target = $region28
        $region27: #{tpu_custom_call.1} parent=11 // pred_region
          _
        $region28: #{tpu_custom_call.1} parent=11 // pred_fallthru
          _
      $region12: #{tpu_custom_call.1} parent=5 // pred_fallthru
        _
      %p201 = scmp.lt.s32.totalorder %s18, 2
      // Predicated region
      $region29: #{tpu_custom_call.1} parent=5 // pred_check
        %p202 = pneg %p201
      $region30: #{tpu_custom_call.1} parent=5 // pred_check_branch
        %204 = sbr.rel (%p202) target = $region32
      $region31: #{tpu_custom_call.1} parent=5 // pred_region
        // Predicated region
        $region33: #{tpu_custom_call.1} parent=31 // pred_check
          %p205 = pneg %p38
        $region34: #{tpu_custom_call.1} parent=31 // pred_check_branch
          %207 = sbr.rel (%p205) target = $region36
        $region35: #{tpu_custom_call.1} parent=31 // pred_region
          %s208 = sand.u32 %s28, 1
          %s209 = scalar_lea.sflag [#allocation4], %s208
          %s210 = sand.u32 %s28, 1
          %s211 = smul.addr %s210, 8
          %s212 = scalar_lea.vmem [#allocation3], %s211
          %s214 = ssub.s32 128, 128
          %215 = vsyncadd %s209, %s214
          %s216 = smul.addr %s18, 128
          %s217 = scalar_lea.hbm %s0, %s216
          %s219 = sshll.u32 %s212, 4
          %s220 = int_to_ptr.vmem [resolvable:$true] %s219
          %222 = dma.hbm_to_vmem [thread:$0]  %s217, 128, %s220, %s209
        $region36: #{tpu_custom_call.1} parent=31 // pred_fallthru
          _
      $region32: #{tpu_custom_call.1} parent=5 // pred_fallthru
        _
      %p223 = scmp.le.s32.totalorder 1, %s18
      %p224 = scmp.lt.s32.totalorder %s18, 3
      %p225 = pnand %p223, %p224
      %p226 = pneg %p225
      // Predicated region
      $region37: #{tpu_custom_call.1} parent=5 // pred_check
        _
      $region38: #{tpu_custom_call.1} parent=5 // pred_check_branch
        %228 = sbr.rel (%p225) target = $region40
      $region39: #{tpu_custom_call.1} parent=5 // pred_region
        %s229 = ssub.s32 %s18, 1
        %s230 = sand.u32 %s31, 1
        %s231 = scalar_lea.sflag [#allocation4], %s230
        %s232 = sand.u32 %s31, 1
        %s233 = smul.addr %s232, 8
        %s234 = scalar_lea.vmem [#allocation3], %s233
        // Predicated region
        $region41: #{tpu_custom_call.1} parent=39 // pred_check
          %p235 = pneg %p44
        $region42: #{tpu_custom_call.1} parent=39 // pred_check_branch
          %237 = sbr.rel (%p235) target = $region44
        $region43: #{tpu_custom_call.1} parent=39 // pred_region
          %238 = dma.done %s231, 128
        $region44: #{tpu_custom_call.1} parent=39 // pred_fallthru
          _
        // Predicated region
        $region45: #{tpu_custom_call.1} parent=39 // pred_check
          %p239 = pneg %p65
        $region46: #{tpu_custom_call.1} parent=39 // pred_check_branch
          %241 = sbr.rel (%p239) target = $region48
        $region47: #{tpu_custom_call.1} parent=39 // pred_region
          %242 = dma.done [#allocation7], 512
        $region48: #{tpu_custom_call.1} parent=39 // pred_fallthru
          _
        // Predicated region
        $region49: #{tpu_custom_call.1} parent=39 // pred_check
          %p243 = pneg %p107
        $region50: #{tpu_custom_call.1} parent=39 // pred_check_branch
          %245 = sbr.rel (%p243) target = $region52
        $region51: #{tpu_custom_call.1} parent=39 // pred_region
          %246 = dma.done [#allocation7], 2048
        $region52: #{tpu_custom_call.1} parent=39 // pred_fallthru
          _
        %s247 = sand.u32 %s31, 1
        %s248 = scalar_lea.sflag [#allocation4], %s247
        %s249 = sand.u32 %s31, 1
        %s250 = smul.addr %s249, 8
        %s251 = scalar_lea.vmem [#allocation3], %s250
        %p252 = pneg %p44
        %p253 = pneg %p41
        %p254 = pneg %p65
        %p255 = pneg %p62
        %p256 = pneg %p86
        %p257 = pneg %p83
        %p258 = pneg %p107
        %p259 = pneg %p104
        %p260 = pneg %p128
        %p261 = pneg %p125
        %p262 = pneg %p154
        %p263 = pneg %p151
        %s264 = sand.u32 %s141, 1
        %s265 = scalar_lea.sflag [#allocation5], %s264
        %s266 = sand.u32 %s141, 1
        %s267 = smul.addr %s266, 8
        %s268 = scalar_lea.vmem [#allocation9], %s267
        %v269 = vld [vmem:[#allocation6] sm:$0xff]
        %v270 = vld [vmem:[#allocation6 + $0x8] sm:$0xff]
        %v271 = vld [vmem:[#allocation6 + $0x10] sm:$0xff]
        %v272 = vld [vmem:[#allocation6 + $0x18] sm:$0xff]
        %v273 = vld [vmem:[%s2] sm:$0x1]
        %v274 = vld [vmem:[%s234] sm:$0xff]
        %p275 = scmp.eq.s32.totalorder %s23, 0
        // Predicated region
        $region53: #{tpu_custom_call.1} parent=39 // pred_check
          %p276 = pneg %p275
        $region54: #{tpu_custom_call.1} parent=39 // pred_check_branch
          %278 = sbr.rel (%p276) target = $region56
        $region55: #{tpu_custom_call.1} parent=39 // pred_region
          %vm279 = vcmask 130048
          %280 = vst.msk [vmem:[#allocation2 + $0x8] sm:$0xff] %vm279, 0.0
        $region56: #{tpu_custom_call.1} parent=39 // pred_fallthru
          _
        %vm281 = vcmask 130048
        %282 = vst.msk [vmem:[#allocation2] sm:$0xff] %vm281, %v274
        %v283 = vld [vmem:[#allocation2 + $0x1] sm:$0xff]
        %v285 = vsel %vm281, %v283, 0
        %287 = vmatprep.subr.mxu0 0.0
        %288 = vmatpush1.msra.mxu0 %v270
        %289 = vmatprep.subr.mxu0 0.0
        %290 = vmatpush1.msra.mxu0 %v272
        %291 = vmatprep.subr.mxu0 0.0
        %292 = vmatpush1.msra.mxu0 0.0
        %293 = vmatprep.subr.mxu0 0.0
        %294 = vmatpush1.msra.mxu0 0.0
        %295 = vmatprep.subr.mxu0 0.0
        %296 = vmatpush1.msra.mxu0 0.0
        %297 = vmatprep.subr.mxu0 0.0
        %298 = vmatpush1.msra.mxu0 0.0
        %299 = vmatprep.subr.mxu0 0.0
        %300 = vmatpush1.msra.mxu0 0.0
        %301 = vmatprep.subr.mxu0 0.0
        %302 = vmatpush1.msra.mxu0 0.0
        %303 = vmatprep.subr.mxu0 0.0
        %304 = vmatpush1.msra.mxu0 0.0
        %305 = vmatprep.subr.mxu0 0.0
        %306 = vmatpush1.msra.mxu0 0.0
        %307 = vmatprep.subr.mxu0 0.0
        %308 = vmatpush1.msra.mxu0 0.0
        %309 = vmatprep.subr.mxu0 0.0
        %310 = vmatpush1.msra.mxu0 0.0
        %311 = vmatprep.subr.mxu0 0.0
        %312 = vmatpush1.msra.mxu0 0.0
        %313 = vmatprep.subr.mxu0 0.0
        %314 = vmatpush1.msra.mxu0 0.0
        %315 = vmatprep.subr.mxu0 0.0
        %316 = vmatpush1.msra.mxu0 0.0
        %317 = vmatprep.subr.mxu0 0.0
        %318 = vmatpush1.msra.mxu0 0.0
        %319 = vmatprep.subr.mxu0 0.0
        %320 = vmatpush1.msra.mxu0 0.0
        %321 = vmatprep.subr.mxu0 0.0
        %322 = vmatpush1.msra.mxu0 0.0
        %323 = vmatprep.subr.mxu0 0.0
        %324 = vmatpush1.msra.mxu0 0.0
        %325 = vmatprep.subr.mxu0 0.0
        %326 = vmatpush1.msra.mxu0 0.0
        %327 = vmatprep.subr.mxu0 0.0
        %328 = vmatpush1.msra.mxu0 0.0
        %329 = vmatprep.subr.mxu0 0.0
        %330 = vmatpush1.msra.mxu0 0.0
        %331 = vmatprep.subr.mxu0 0.0
        %332 = vmatpush1.msra.mxu0 0.0
        %333 = vmatprep.subr.mxu0 0.0
        %334 = vmatpush1.msra.mxu0 0.0
        %335 = vmatprep.subr.mxu0 0.0
        %336 = vmatpush1.msra.mxu0 0.0
        %337 = vmatprep.subr.mxu0 0.0
        %338 = vmatpush1.msra.mxu0 0.0
        %339 = vmatprep.subr.mxu0 0.0
        %340 = vmatpush1.msra.mxu0 0.0
        %341 = vmatprep.subr.mxu0 0.0
        %342 = vmatpush1.msra.mxu0 0.0
        %343 = vmatprep.subr.mxu0 0.0
        %344 = vmatpush1.msra.mxu0 0.0
        %345 = vmatprep.subr.mxu0 0.0
        %346 = vmatpush1.msra.mxu0 0.0
        %347 = vmatprep.subr.mxu0 0.0
        %348 = vmatpush1.msra.mxu0 0.0
        %349 = vmatprep.subr.mxu0 0.0
        %350 = vmatpush1.msra.mxu0 0.0
        %351 = vmatprep.mubr.f32.mxu0 0.0
        %352 = vmatmul.mubr.f32.gmra.mrb[0].mxu0 %v285
        %v353 = vpop.f32.mrb[0].mxu0
        %v354 = vadd.f32 0.0, %v353
        %v355 = vpop.f32.mrb[0].mxu0
        %356 = vdwg.mxu0
        %v358 = vsel %vm281, %v274, 0
        %360 = vmatprep.subr.mxu0 0.0
        %361 = vmatpush1.msra.mxu0 %v269
        %362 = vmatprep.subr.mxu0 0.0
        %363 = vmatpush1.msra.mxu0 %v271
        %364 = vmatprep.subr.mxu0 0.0
        %365 = vmatpush1.msra.mxu0 0.0
        %366 = vmatprep.subr.mxu0 0.0
        %367 = vmatpush1.msra.mxu0 0.0
        %368 = vmatprep.subr.mxu0 0.0
        %369 = vmatpush1.msra.mxu0 0.0
        %370 = vmatprep.subr.mxu0 0.0
        %371 = vmatpush1.msra.mxu0 0.0
        %372 = vmatprep.subr.mxu0 0.0
        %373 = vmatpush1.msra.mxu0 0.0
        %374 = vmatprep.subr.mxu0 0.0
        %375 = vmatpush1.msra.mxu0 0.0
        %376 = vmatprep.subr.mxu0 0.0
        %377 = vmatpush1.msra.mxu0 0.0
        %378 = vmatprep.subr.mxu0 0.0
        %379 = vmatpush1.msra.mxu0 0.0
        %380 = vmatprep.subr.mxu0 0.0
        %381 = vmatpush1.msra.mxu0 0.0
        %382 = vmatprep.subr.mxu0 0.0
        %383 = vmatpush1.msra.mxu0 0.0
        %384 = vmatprep.subr.mxu0 0.0
        %385 = vmatpush1.msra.mxu0 0.0
        %386 = vmatprep.subr.mxu0 0.0
        %387 = vmatpush1.msra.mxu0 0.0
        %388 = vmatprep.subr.mxu0 0.0
        %389 = vmatpush1.msra.mxu0 0.0
        %390 = vmatprep.subr.mxu0 0.0
        %391 = vmatpush1.msra.mxu0 0.0
        %392 = vmatprep.subr.mxu0 0.0
        %393 = vmatpush1.msra.mxu0 0.0
        %394 = vmatprep.subr.mxu0 0.0
        %395 = vmatpush1.msra.mxu0 0.0
        %396 = vmatprep.subr.mxu0 0.0
        %397 = vmatpush1.msra.mxu0 0.0
        %398 = vmatprep.subr.mxu0 0.0
        %399 = vmatpush1.msra.mxu0 0.0
        %400 = vmatprep.subr.mxu0 0.0
        %401 = vmatpush1.msra.mxu0 0.0
        %402 = vmatprep.subr.mxu0 0.0
        %403 = vmatpush1.msra.mxu0 0.0
        %404 = vmatprep.subr.mxu0 0.0
        %405 = vmatpush1.msra.mxu0 0.0
        %406 = vmatprep.subr.mxu0 0.0
        %407 = vmatpush1.msra.mxu0 0.0
        %408 = vmatprep.subr.mxu0 0.0
        %409 = vmatpush1.msra.mxu0 0.0
        %410 = vmatprep.subr.mxu0 0.0
        %411 = vmatpush1.msra.mxu0 0.0
        %412 = vmatprep.subr.mxu0 0.0
        %413 = vmatpush1.msra.mxu0 0.0
        %414 = vmatprep.subr.mxu0 0.0
        %415 = vmatpush1.msra.mxu0 0.0
        %416 = vmatprep.subr.mxu0 0.0
        %417 = vmatpush1.msra.mxu0 0.0
        %418 = vmatprep.subr.mxu0 0.0
        %419 = vmatpush1.msra.mxu0 0.0
        %420 = vmatprep.subr.mxu0 0.0
        %421 = vmatpush1.msra.mxu0 0.0
        %422 = vmatprep.subr.mxu0 0.0
        %423 = vmatpush1.msra.mxu0 0.0
        %424 = vmatprep.mubr.f32.mxu0 0.0
        %425 = vmatmul.mubr.f32.gmra.mrb[0].mxu0 %v358
        %v426 = vpop.f32.mrb[0].mxu0
        %v427 = vadd.f32 %v354, %v426
        %v428 = vpop.f32.mrb[0].mxu0
        %429 = vdwg.mxu0
        %v431 = vlaneseq
        %v432 = vshrl.u32 %v431, 7
        %v433 = vsub.s32 0, %v432
        %v434 = vrot.slane %v273, %v433
        %v436 = vadd.f32 %v427, %v434
        %v437 = vmax.f32 %v436, 0.0
        %v438 = vld [vmem:[#allocation8] sm:$0xff]
        %v439 = vld [vmem:[#allocation8 + $0x8] sm:$0xff]
        %v440 = vld [vmem:[#allocation8 + $0x10] sm:$0xff]
        %v441 = vld [vmem:[#allocation8 + $0x18] sm:$0xff]
        %v442 = vld [vmem:[#allocation8 + $0x20] sm:$0xff]
        %v443 = vld [vmem:[#allocation8 + $0x28] sm:$0xff]
        %v444 = vld [vmem:[#allocation8 + $0x30] sm:$0xff]
        %v445 = vld [vmem:[#allocation8 + $0x38] sm:$0xff]
        %v446 = vld [vmem:[#allocation8 + $0x40] sm:$0xff]
        %v447 = vld [vmem:[#allocation8 + $0x48] sm:$0xff]
        %v448 = vld [vmem:[#allocation8 + $0x50] sm:$0xff]
        %v449 = vld [vmem:[#allocation8 + $0x58] sm:$0xff]
        %v450 = vld [vmem:[#allocation8 + $0x60] sm:$0xff]
        %v451 = vld [vmem:[#allocation8 + $0x68] sm:$0xff]
        %v452 = vld [vmem:[#allocation8 + $0x70] sm:$0xff]
        %v453 = vld [vmem:[#allocation8 + $0x78] sm:$0xff]
        %v454 = vld [vmem:[%s4] sm:$0x1]
        %v456 = vlaneseq
        %v457 = vshrl.u32 %v456, 7
        %v458 = vsub.s32 0, %v457
        %v459 = vrot.slane %v454, %v458
        %461 = vmatprep.subr.mxu0 0.0
        %462 = vmatpush1.msra.mxu0 %v438
        %463 = vmatprep.subr.mxu0 0.0
        %464 = vmatpush1.msra.mxu0 %v439
        %465 = vmatprep.subr.mxu0 0.0
        %466 = vmatpush1.msra.mxu0 %v440
        %467 = vmatprep.subr.mxu0 0.0
        %468 = vmatpush1.msra.mxu0 %v441
        %469 = vmatprep.subr.mxu0 0.0
        %470 = vmatpush1.msra.mxu0 %v442
        %471 = vmatprep.subr.mxu0 0.0
        %472 = vmatpush1.msra.mxu0 %v443
        %473 = vmatprep.subr.mxu0 0.0
        %474 = vmatpush1.msra.mxu0 %v444
        %475 = vmatprep.subr.mxu0 0.0
        %476 = vmatpush1.msra.mxu0 %v445
        %477 = vmatprep.subr.mxu0 0.0
        %478 = vmatpush1.msra.mxu0 %v446
        %479 = vmatprep.subr.mxu0 0.0
        %480 = vmatpush1.msra.mxu0 %v447
        %481 = vmatprep.subr.mxu0 0.0
        %482 = vmatpush1.msra.mxu0 %v448
        %483 = vmatprep.subr.mxu0 0.0
        %484 = vmatpush1.msra.mxu0 %v449
        %485 = vmatprep.subr.mxu0 0.0
        %486 = vmatpush1.msra.mxu0 %v450
        %487 = vmatprep.subr.mxu0 0.0
        %488 = vmatpush1.msra.mxu0 %v451
        %489 = vmatprep.subr.mxu0 0.0
        %490 = vmatpush1.msra.mxu0 %v452
        %491 = vmatprep.subr.mxu0 0.0
        %492 = vmatpush1.msra.mxu0 %v453
        %493 = vmatprep.subr.mxu0 0.0
        %494 = vmatpush1.msra.mxu0 0.0
        %495 = vmatprep.subr.mxu0 0.0
        %496 = vmatpush1.msra.mxu0 0.0
        %497 = vmatprep.subr.mxu0 0.0
        %498 = vmatpush1.msra.mxu0 0.0
        %499 = vmatprep.subr.mxu0 0.0
        %500 = vmatpush1.msra.mxu0 0.0
        %501 = vmatprep.subr.mxu0 0.0
        %502 = vmatpush1.msra.mxu0 0.0
        %503 = vmatprep.subr.mxu0 0.0
        %504 = vmatpush1.msra.mxu0 0.0
        %505 = vmatprep.subr.mxu0 0.0
        %506 = vmatpush1.msra.mxu0 0.0
        %507 = vmatprep.subr.mxu0 0.0
        %508 = vmatpush1.msra.mxu0 0.0
        %509 = vmatprep.subr.mxu0 0.0
        %510 = vmatpush1.msra.mxu0 0.0
        %511 = vmatprep.subr.mxu0 0.0
        %512 = vmatpush1.msra.mxu0 0.0
        %513 = vmatprep.subr.mxu0 0.0
        %514 = vmatpush1.msra.mxu0 0.0
        %515 = vmatprep.subr.mxu0 0.0
        %516 = vmatpush1.msra.mxu0 0.0
        %517 = vmatprep.subr.mxu0 0.0
        %518 = vmatpush1.msra.mxu0 0.0
        %519 = vmatprep.subr.mxu0 0.0
        %520 = vmatpush1.msra.mxu0 0.0
        %521 = vmatprep.subr.mxu0 0.0
        %522 = vmatpush1.msra.mxu0 0.0
        %523 = vmatprep.subr.mxu0 0.0
        %524 = vmatpush1.msra.mxu0 0.0
        %525 = vmatprep.mubr.f32.mxu0 0.0
        %526 = vmatmul.mubr.f32.gmra.mrb[0].mxu0 %v437
        %v527 = vpop.f32.mrb[0].mxu0
        %v528 = vadd.f32 %v459, %v527
        %v529 = vpop.f32.mrb[0].mxu0
        %530 = vdwg.mxu0
        %531 = vst [vmem:[%s268] sm:$0xff] %v528
        %s532 = sand.u32 %s141, 1
        %s533 = scalar_lea.sflag [#allocation5], %s532
        %s534 = sand.u32 %s141, 1
        %s535 = smul.addr %s534, 8
        %s536 = scalar_lea.vmem [#allocation9], %s535
        // Predicated region
        $region57: #{tpu_custom_call.1} parent=39 // pred_check
          %p537 = pneg %p151
        $region58: #{tpu_custom_call.1} parent=39 // pred_check_branch
          %539 = sbr.rel (%p537) target = $region60
        $region59: #{tpu_custom_call.1} parent=39 // pred_region
          %s541 = ssub.s32 128, 128
          %542 = vsyncadd %s533, %s541
          %s543 = smul.addr %s23, 128
          %s544 = scalar_lea.hbm %s5, %s543
          %s546 = sshll.u32 %s536, 4
          %s547 = int_to_ptr.vmem [resolvable:$true] %s546
          %549 = dma.vmem_to_hbm [thread:$0]  %s547, 128, %s544, %s533
        $region60: #{tpu_custom_call.1} parent=39 // pred_fallthru
          _
      $region40: #{tpu_custom_call.1} parent=5 // pred_fallthru
        _
      %p550 = scmp.le.s32.totalorder 2, %s18
      // Predicated region
      $region61: #{tpu_custom_call.1} parent=5 // pred_check
        %p551 = pneg %p550
      $region62: #{tpu_custom_call.1} parent=5 // pred_check_branch
        %553 = sbr.rel (%p551) target = $region64
      $region63: #{tpu_custom_call.1} parent=5 // pred_region
        %s554 = ssub.s32 %s18, 2
        // Predicated region
        $region65: #{tpu_custom_call.1} parent=63 // pred_check
          %p555 = pneg %p157
        $region66: #{tpu_custom_call.1} parent=63 // pred_check_branch
          %557 = sbr.rel (%p555) target = $region68
        $region67: #{tpu_custom_call.1} parent=63 // pred_region
          %s558 = sand.u32 %s142, 1
          %s559 = scalar_lea.sflag [#allocation5], %s558
          %s560 = sand.u32 %s142, 1
          %s561 = smul.addr %s560, 8
          %s562 = scalar_lea.vmem [#allocation9], %s561
          %563 = dma.done %s559, 128
        $region68: #{tpu_custom_call.1} parent=63 // pred_fallthru
          _
      $region64: #{tpu_custom_call.1} parent=5 // pred_fallthru
        _
    $region6: #{tpu_custom_call.1} parent=1 // loop_footer
      %s22 = sadd.s32 1, %s18
    $region7: #{tpu_custom_call.1} parent=1 // loop_footer_branch
      %17 = sbr.rel target = $region3
    $region8: #{tpu_custom_call.1} parent=1 // loop_exit
      _
    %564 = vsyncpa [#allocation4], 1
    %s565 = scalar_lea.sflag [#allocation4], 1
    %566 = vsyncpa %s565, 1
    %567 = vsyncpa [#allocation7], 1
    %568 = vsyncpa [#allocation5], 1
    %s569 = scalar_lea.sflag [#allocation5], 1
    %570 = vsyncpa %s569, 1

</llo_original>
